<compile_context>
chip_gen: v5e
topology: v5e:2x2
jax: 0.10.0
libtpu: 0.0.40
codegen_flags: <defaults>
</compile_context>

<pallas_src>
import jax
import jax.numpy as jnp
from jax.experimental import pallas as pl
from jax.experimental.pallas import tpu as pltpu

_LANE = 128        # vreg lane width
_ROW_GROUP = 64    # rows per in-register accumulation group (8 f32 vregs)


def _binary_classifier_kernel(x_ref, w_ref, b_ref, o_ref):
    """sigmoid(X_tile @ W.T + b) for one batch tile (VPU/XLU/EUP only).

    x_ref: (tb, F) f32 VMEM batch tile
    w_ref: (1, F)  f32 VMEM weight row (resident across the grid)
    b_ref: (1,)    f32 SMEM bias scalar
    o_ref: (tb, 1) f32 VMEM output tile
    """
    tb, f = x_ref.shape
    n_full = f // _LANE                  # full 128-lane chunks
    tail = f - n_full * _LANE            # leftover lanes (< 128)
    bias = b_ref[0]

    # Hoist the per-chunk weight loads out of the row-group loop (the loads are
    # cheap vlds; hoisting avoids redundant per-group slicing work).
    w_chunks = [w_ref[:, c * _LANE:(c + 1) * _LANE] for c in range(n_full)]
    w_tail = w_ref[:, n_full * _LANE:] if tail else None

    n_groups = (tb + _ROW_GROUP - 1) // _ROW_GROUP
    for g in range(n_groups):
        r0 = g * _ROW_GROUP
        rows = min(_ROW_GROUP, tb - r0)
        rsl = slice(r0, r0 + rows)

        if n_full:
            # Two independent accumulators (each (rows,128) f32 = <=8 vregs):
            # register-resident and a halved serial-add chain.
            acc0 = x_ref[rsl, 0:_LANE] * w_chunks[0]
            acc1 = None
            for c in range(1, n_full):
                lo = c * _LANE
                term = x_ref[rsl, lo:lo + _LANE] * w_chunks[c]
                if c & 1:
                    acc1 = term if acc1 is None else acc1 + term
                else:
                    acc0 = acc0 + term
            acc = acc0 if acc1 is None else acc0 + acc1
            rowsum = jnp.sum(acc, axis=-1, keepdims=True)
            if tail:
                rowsum = rowsum + jnp.sum(
                    x_ref[rsl, n_full * _LANE:] * w_tail, axis=-1, keepdims=True)
        else:
            # F < 128: a single (masked) chunk.
            rowsum = jnp.sum(x_ref[rsl, :] * w_ref[...], axis=-1, keepdims=True)

        z = rowsum + bias
        # Explicit, overflow-safe sigmoid (exp on the EUP slot).
        o_ref[rsl, :] = (1.0 / (1.0 + jnp.exp(-z))).astype(o_ref.dtype)


def _round_down8(n):
    return max(8, (n // 8) * 8)


def _choose_row_tile(batch, features, itemsize=4, budget_bytes=40 << 20):
    """Largest row tile whose double-buffered X block fits the VMEM budget.

    Keeps tiles >= 512 rows when possible (near HBM roofline) while staying
    well inside v7x's 64 MiB physical VMEM for large feature counts.
    """
    per_row = 2 * features * itemsize        # double-buffered X bytes per row
    max_rows = max(8, budget_bytes // per_row)
    tb = min(batch, 1024, max_rows)
    if tb >= batch:
        return batch                          # single block == full array dims
    return _round_down8(tb)


@jax.jit
def binary_classifier_forward(x, weight, bias):
    """out = sigmoid(x @ weight.T + bias), computed in a Pallas kernel.

    x:      (B, F) float32
    weight: (1, F) float32
    bias:   (1,)   float32
    returns (B, 1) float32
    """
    B, F = x.shape
    assert weight.shape == (1, F)
    assert bias.shape == (1,)

    x = x.astype(jnp.float32)
    weight = weight.astype(jnp.float32)
    bias = bias.astype(jnp.float32)

    tb = _choose_row_tile(B, F)
    grid = (pl.cdiv(B, tb),)                  # partial last tile allowed

    # VMEM budget: double-buffered X block + weight + output blocks + headroom.
    need = 2 * tb * F * 4 + 2 * F * 4 + 2 * tb * 4
    vmem_limit = int(min(max(need + (8 << 20), 16 << 20), 112 << 20))

    return pl.pallas_call(
        _binary_classifier_kernel,
        out_shape=jax.ShapeDtypeStruct((B, 1), jnp.float32),
        grid_spec=pltpu.PrefetchScalarGridSpec(
            num_scalar_prefetch=0,
            grid=grid,
            in_specs=[
                pl.BlockSpec((tb, F), lambda i: (i, 0)),             # X tile
                pl.BlockSpec((1, F), lambda i: (0, 0)),              # weight row
                pl.BlockSpec(memory_space=pltpu.MemorySpace.SMEM),   # bias scalar
            ],
            out_specs=pl.BlockSpec((tb, 1), lambda i: (i, 0)),
        ),
        compiler_params=pltpu.CompilerParams(
            dimension_semantics=("parallel",),
            vmem_limit_bytes=vmem_limit,
        ),
    )(x, weight, bias)


def _run_case(key, batch, num_features):
    kx, kw, kb = jax.random.split(key, 3)
    bound = 1.0 / (num_features ** 0.5)       # nn.Linear default init range
    x = jax.random.normal(kx, (batch, num_features), dtype=jnp.float32)
    weight = jax.random.uniform(kw, (1, num_features), jnp.float32, -bound, bound)
    bias = jax.random.uniform(kb, (1,), jnp.float32, -bound, bound)

    out = jax.block_until_ready(binary_classifier_forward(x, weight, bias))
    ref = jax.nn.sigmoid(x @ weight.T + bias)

    assert out.shape == (batch, 1) and out.dtype == jnp.float32
    assert jnp.allclose(out, ref, atol=1e-5, rtol=1e-5), (
        f"mismatch at batch={batch}, F={num_features}")
    return out


if __name__ == "__main__":
    key = jax.random.PRNGKey(0)
    k0, k1, k2 = jax.random.split(key, 3)

    # Module-default feature count with a small batch.
    _run_case(k0, batch=8, num_features=4096)
    # Tiled batch (partial last tile exercises the pl.cdiv grid path).
    _run_case(k1, batch=2000, num_features=256)
    # Feature count that is not a multiple of 128 (masked tail chunk path).
    _run_case(k2, batch=96, num_features=200)

    print("KERNEL_OK")
</pallas_src>

<mosaic_0001>
module attributes {stable_mosaic.version = 11 : i64} {
  func.func @_binary_classifier_kernel(%arg0: i32, %arg1: memref<8x4096xf32, #tpu.memory_space<vmem>>, %arg2: memref<1x4096xf32, #tpu.memory_space<vmem>>, %arg3: memref<1xf32, #tpu.memory_space<smem>>, %arg4: memref<8x1xf32, #tpu.memory_space<vmem>>) attributes {dimension_semantics = [#tpu.dimension_semantics<parallel>], iteration_bounds = array<i64: 1>, scalar_prefetch = 0 : i64, scratch_operands = 0 : i64, tpu.core_type = #tpu.core_type<tc>, window_params = [{transform_indices = @transform_0, window_bounds = array<i64: 8, 4096>}, {pipeline_mode = #tpu.pipeline_mode<synchronous>, transform_indices = @transform_1, window_bounds = array<i64: 1, 4096>}, {transform_indices = @transform_2, window_bounds = array<i64: 1>}, {transform_indices = @transform_3, window_bounds = array<i64: 8, 1>}]} {
    %c0 = arith.constant 0 : index
    %0 = memref.load %arg3[%c0] : memref<1xf32, #tpu.memory_space<smem>>
    %c0_0 = arith.constant 0 : index
    %c0_1 = arith.constant 0 : index
    %1 = vector.load %arg2[%c0_0, %c0_1] : memref<1x4096xf32, #tpu.memory_space<vmem>>, vector<1x128xf32>
    %c0_2 = arith.constant 0 : index
    %c128 = arith.constant 128 : index
    %2 = vector.load %arg2[%c0_2, %c128] : memref<1x4096xf32, #tpu.memory_space<vmem>>, vector<1x128xf32>
    %c0_3 = arith.constant 0 : index
    %c256 = arith.constant 256 : index
    %3 = vector.load %arg2[%c0_3, %c256] : memref<1x4096xf32, #tpu.memory_space<vmem>>, vector<1x128xf32>
    %c0_4 = arith.constant 0 : index
    %c384 = arith.constant 384 : index
    %4 = vector.load %arg2[%c0_4, %c384] : memref<1x4096xf32, #tpu.memory_space<vmem>>, vector<1x128xf32>
    %c0_5 = arith.constant 0 : index
    %c512 = arith.constant 512 : index
    %5 = vector.load %arg2[%c0_5, %c512] : memref<1x4096xf32, #tpu.memory_space<vmem>>, vector<1x128xf32>
    %c0_6 = arith.constant 0 : index
    %c640 = arith.constant 640 : index
    %6 = vector.load %arg2[%c0_6, %c640] : memref<1x4096xf32, #tpu.memory_space<vmem>>, vector<1x128xf32>
    %c0_7 = arith.constant 0 : index
    %c768 = arith.constant 768 : index
    %7 = vector.load %arg2[%c0_7, %c768] : memref<1x4096xf32, #tpu.memory_space<vmem>>, vector<1x128xf32>
    %c0_8 = arith.constant 0 : index
    %c896 = arith.constant 896 : index
    %8 = vector.load %arg2[%c0_8, %c896] : memref<1x4096xf32, #tpu.memory_space<vmem>>, vector<1x128xf32>
    %c0_9 = arith.constant 0 : index
    %c1024 = arith.constant 1024 : index
    %9 = vector.load %arg2[%c0_9, %c1024] : memref<1x4096xf32, #tpu.memory_space<vmem>>, vector<1x128xf32>
    %c0_10 = arith.constant 0 : index
    %c1152 = arith.constant 1152 : index
    %10 = vector.load %arg2[%c0_10, %c1152] : memref<1x4096xf32, #tpu.memory_space<vmem>>, vector<1x128xf32>
    %c0_11 = arith.constant 0 : index
    %c1280 = arith.constant 1280 : index
    %11 = vector.load %arg2[%c0_11, %c1280] : memref<1x4096xf32, #tpu.memory_space<vmem>>, vector<1x128xf32>
    %c0_12 = arith.constant 0 : index
    %c1408 = arith.constant 1408 : index
    %12 = vector.load %arg2[%c0_12, %c1408] : memref<1x4096xf32, #tpu.memory_space<vmem>>, vector<1x128xf32>
    %c0_13 = arith.constant 0 : index
    %c1536 = arith.constant 1536 : index
    %13 = vector.load %arg2[%c0_13, %c1536] : memref<1x4096xf32, #tpu.memory_space<vmem>>, vector<1x128xf32>
    %c0_14 = arith.constant 0 : index
    %c1664 = arith.constant 1664 : index
    %14 = vector.load %arg2[%c0_14, %c1664] : memref<1x4096xf32, #tpu.memory_space<vmem>>, vector<1x128xf32>
    %c0_15 = arith.constant 0 : index
    %c1792 = arith.constant 1792 : index
    %15 = vector.load %arg2[%c0_15, %c1792] : memref<1x4096xf32, #tpu.memory_space<vmem>>, vector<1x128xf32>
    %c0_16 = arith.constant 0 : index
    %c1920 = arith.constant 1920 : index
    %16 = vector.load %arg2[%c0_16, %c1920] : memref<1x4096xf32, #tpu.memory_space<vmem>>, vector<1x128xf32>
    %c0_17 = arith.constant 0 : index
    %c2048 = arith.constant 2048 : index
    %17 = vector.load %arg2[%c0_17, %c2048] : memref<1x4096xf32, #tpu.memory_space<vmem>>, vector<1x128xf32>
    %c0_18 = arith.constant 0 : index
    %c2176 = arith.constant 2176 : index
    %18 = vector.load %arg2[%c0_18, %c2176] : memref<1x4096xf32, #tpu.memory_space<vmem>>, vector<1x128xf32>
    %c0_19 = arith.constant 0 : index
    %c2304 = arith.constant 2304 : index
    %19 = vector.load %arg2[%c0_19, %c2304] : memref<1x4096xf32, #tpu.memory_space<vmem>>, vector<1x128xf32>
    %c0_20 = arith.constant 0 : index
    %c2432 = arith.constant 2432 : index
    %20 = vector.load %arg2[%c0_20, %c2432] : memref<1x4096xf32, #tpu.memory_space<vmem>>, vector<1x128xf32>
    %c0_21 = arith.constant 0 : index
    %c2560 = arith.constant 2560 : index
    %21 = vector.load %arg2[%c0_21, %c2560] : memref<1x4096xf32, #tpu.memory_space<vmem>>, vector<1x128xf32>
    %c0_22 = arith.constant 0 : index
    %c2688 = arith.constant 2688 : index
    %22 = vector.load %arg2[%c0_22, %c2688] : memref<1x4096xf32, #tpu.memory_space<vmem>>, vector<1x128xf32>
    %c0_23 = arith.constant 0 : index
    %c2816 = arith.constant 2816 : index
    %23 = vector.load %arg2[%c0_23, %c2816] : memref<1x4096xf32, #tpu.memory_space<vmem>>, vector<1x128xf32>
    %c0_24 = arith.constant 0 : index
    %c2944 = arith.constant 2944 : index
    %24 = vector.load %arg2[%c0_24, %c2944] : memref<1x4096xf32, #tpu.memory_space<vmem>>, vector<1x128xf32>
    %c0_25 = arith.constant 0 : index
    %c3072 = arith.constant 3072 : index
    %25 = vector.load %arg2[%c0_25, %c3072] : memref<1x4096xf32, #tpu.memory_space<vmem>>, vector<1x128xf32>
    %c0_26 = arith.constant 0 : index
    %c3200 = arith.constant 3200 : index
    %26 = vector.load %arg2[%c0_26, %c3200] : memref<1x4096xf32, #tpu.memory_space<vmem>>, vector<1x128xf32>
    %c0_27 = arith.constant 0 : index
    %c3328 = arith.constant 3328 : index
    %27 = vector.load %arg2[%c0_27, %c3328] : memref<1x4096xf32, #tpu.memory_space<vmem>>, vector<1x128xf32>
    %c0_28 = arith.constant 0 : index
    %c3456 = arith.constant 3456 : index
    %28 = vector.load %arg2[%c0_28, %c3456] : memref<1x4096xf32, #tpu.memory_space<vmem>>, vector<1x128xf32>
    %c0_29 = arith.constant 0 : index
    %c3584 = arith.constant 3584 : index
    %29 = vector.load %arg2[%c0_29, %c3584] : memref<1x4096xf32, #tpu.memory_space<vmem>>, vector<1x128xf32>
    %c0_30 = arith.constant 0 : index
    %c3712 = arith.constant 3712 : index
    %30 = vector.load %arg2[%c0_30, %c3712] : memref<1x4096xf32, #tpu.memory_space<vmem>>, vector<1x128xf32>
    %c0_31 = arith.constant 0 : index
    %c3840 = arith.constant 3840 : index
    %31 = vector.load %arg2[%c0_31, %c3840] : memref<1x4096xf32, #tpu.memory_space<vmem>>, vector<1x128xf32>
    %c0_32 = arith.constant 0 : index
    %c3968 = arith.constant 3968 : index
    %32 = vector.load %arg2[%c0_32, %c3968] : memref<1x4096xf32, #tpu.memory_space<vmem>>, vector<1x128xf32>
    %c0_33 = arith.constant 0 : index
    %c0_34 = arith.constant 0 : index
    %33 = vector.load %arg1[%c0_33, %c0_34] : memref<8x4096xf32, #tpu.memory_space<vmem>>, vector<8x128xf32>
    %34 = vector.broadcast %1 : vector<1x128xf32> to vector<8x128xf32>
    %35 = arith.mulf %33, %34 : vector<8x128xf32>
    %c0_35 = arith.constant 0 : index
    %c128_36 = arith.constant 128 : index
    %36 = vector.load %arg1[%c0_35, %c128_36] : memref<8x4096xf32, #tpu.memory_space<vmem>>, vector<8x128xf32>
    %37 = vector.broadcast %2 : vector<1x128xf32> to vector<8x128xf32>
    %38 = arith.mulf %36, %37 : vector<8x128xf32>
    %c0_37 = arith.constant 0 : index
    %c256_38 = arith.constant 256 : index
    %39 = vector.load %arg1[%c0_37, %c256_38] : memref<8x4096xf32, #tpu.memory_space<vmem>>, vector<8x128xf32>
    %40 = vector.broadcast %3 : vector<1x128xf32> to vector<8x128xf32>
    %41 = arith.mulf %39, %40 : vector<8x128xf32>
    %42 = arith.addf %35, %41 : vector<8x128xf32>
    %c0_39 = arith.constant 0 : index
    %c384_40 = arith.constant 384 : index
    %43 = vector.load %arg1[%c0_39, %c384_40] : memref<8x4096xf32, #tpu.memory_space<vmem>>, vector<8x128xf32>
    %44 = vector.broadcast %4 : vector<1x128xf32> to vector<8x128xf32>
    %45 = arith.mulf %43, %44 : vector<8x128xf32>
    %46 = arith.addf %38, %45 : vector<8x128xf32>
    %c0_41 = arith.constant 0 : index
    %c512_42 = arith.constant 512 : index
    %47 = vector.load %arg1[%c0_41, %c512_42] : memref<8x4096xf32, #tpu.memory_space<vmem>>, vector<8x128xf32>
    %48 = vector.broadcast %5 : vector<1x128xf32> to vector<8x128xf32>
    %49 = arith.mulf %47, %48 : vector<8x128xf32>
    %50 = arith.addf %42, %49 : vector<8x128xf32>
    %c0_43 = arith.constant 0 : index
    %c640_44 = arith.constant 640 : index
    %51 = vector.load %arg1[%c0_43, %c640_44] : memref<8x4096xf32, #tpu.memory_space<vmem>>, vector<8x128xf32>
    %52 = vector.broadcast %6 : vector<1x128xf32> to vector<8x128xf32>
    %53 = arith.mulf %51, %52 : vector<8x128xf32>
    %54 = arith.addf %46, %53 : vector<8x128xf32>
    %c0_45 = arith.constant 0 : index
    %c768_46 = arith.constant 768 : index
    %55 = vector.load %arg1[%c0_45, %c768_46] : memref<8x4096xf32, #tpu.memory_space<vmem>>, vector<8x128xf32>
    %56 = vector.broadcast %7 : vector<1x128xf32> to vector<8x128xf32>
    %57 = arith.mulf %55, %56 : vector<8x128xf32>
    %58 = arith.addf %50, %57 : vector<8x128xf32>
    %c0_47 = arith.constant 0 : index
    %c896_48 = arith.constant 896 : index
    %59 = vector.load %arg1[%c0_47, %c896_48] : memref<8x4096xf32, #tpu.memory_space<vmem>>, vector<8x128xf32>
    %60 = vector.broadcast %8 : vector<1x128xf32> to vector<8x128xf32>
    %61 = arith.mulf %59, %60 : vector<8x128xf32>
    %62 = arith.addf %54, %61 : vector<8x128xf32>
    %c0_49 = arith.constant 0 : index
    %c1024_50 = arith.constant 1024 : index
    %63 = vector.load %arg1[%c0_49, %c1024_50] : memref<8x4096xf32, #tpu.memory_space<vmem>>, vector<8x128xf32>
    %64 = vector.broadcast %9 : vector<1x128xf32> to vector<8x128xf32>
    %65 = arith.mulf %63, %64 : vector<8x128xf32>
    %66 = arith.addf %58, %65 : vector<8x128xf32>
    %c0_51 = arith.constant 0 : index
    %c1152_52 = arith.constant 1152 : index
    %67 = vector.load %arg1[%c0_51, %c1152_52] : memref<8x4096xf32, #tpu.memory_space<vmem>>, vector<8x128xf32>
    %68 = vector.broadcast %10 : vector<1x128xf32> to vector<8x128xf32>
    %69 = arith.mulf %67, %68 : vector<8x128xf32>
    %70 = arith.addf %62, %69 : vector<8x128xf32>
    %c0_53 = arith.constant 0 : index
    %c1280_54 = arith.constant 1280 : index
    %71 = vector.load %arg1[%c0_53, %c1280_54] : memref<8x4096xf32, #tpu.memory_space<vmem>>, vector<8x128xf32>
    %72 = vector.broadcast %11 : vector<1x128xf32> to vector<8x128xf32>
    %73 = arith.mulf %71, %72 : vector<8x128xf32>
    %74 = arith.addf %66, %73 : vector<8x128xf32>
    %c0_55 = arith.constant 0 : index
    %c1408_56 = arith.constant 1408 : index
    %75 = vector.load %arg1[%c0_55, %c1408_56] : memref<8x4096xf32, #tpu.memory_space<vmem>>, vector<8x128xf32>
    %76 = vector.broadcast %12 : vector<1x128xf32> to vector<8x128xf32>
    %77 = arith.mulf %75, %76 : vector<8x128xf32>
    %78 = arith.addf %70, %77 : vector<8x128xf32>
    %c0_57 = arith.constant 0 : index
    %c1536_58 = arith.constant 1536 : index
    %79 = vector.load %arg1[%c0_57, %c1536_58] : memref<8x4096xf32, #tpu.memory_space<vmem>>, vector<8x128xf32>
    %80 = vector.broadcast %13 : vector<1x128xf32> to vector<8x128xf32>
    %81 = arith.mulf %79, %80 : vector<8x128xf32>
    %82 = arith.addf %74, %81 : vector<8x128xf32>
    %c0_59 = arith.constant 0 : index
    %c1664_60 = arith.constant 1664 : index
    %83 = vector.load %arg1[%c0_59, %c1664_60] : memref<8x4096xf32, #tpu.memory_space<vmem>>, vector<8x128xf32>
    %84 = vector.broadcast %14 : vector<1x128xf32> to vector<8x128xf32>
    %85 = arith.mulf %83, %84 : vector<8x128xf32>
    %86 = arith.addf %78, %85 : vector<8x128xf32>
    %c0_61 = arith.constant 0 : index
    %c1792_62 = arith.constant 1792 : index
    %87 = vector.load %arg1[%c0_61, %c1792_62] : memref<8x4096xf32, #tpu.memory_space<vmem>>, vector<8x128xf32>
    %88 = vector.broadcast %15 : vector<1x128xf32> to vector<8x128xf32>
    %89 = arith.mulf %87, %88 : vector<8x128xf32>
    %90 = arith.addf %82, %89 : vector<8x128xf32>
    %c0_63 = arith.constant 0 : index
    %c1920_64 = arith.constant 1920 : index
    %91 = vector.load %arg1[%c0_63, %c1920_64] : memref<8x4096xf32, #tpu.memory_space<vmem>>, vector<8x128xf32>
    %92 = vector.broadcast %16 : vector<1x128xf32> to vector<8x128xf32>
    %93 = arith.mulf %91, %92 : vector<8x128xf32>
    %94 = arith.addf %86, %93 : vector<8x128xf32>
    %c0_65 = arith.constant 0 : index
    %c2048_66 = arith.constant 2048 : index
    %95 = vector.load %arg1[%c0_65, %c2048_66] : memref<8x4096xf32, #tpu.memory_space<vmem>>, vector<8x128xf32>
    %96 = vector.broadcast %17 : vector<1x128xf32> to vector<8x128xf32>
    %97 = arith.mulf %95, %96 : vector<8x128xf32>
    %98 = arith.addf %90, %97 : vector<8x128xf32>
    %c0_67 = arith.constant 0 : index
    %c2176_68 = arith.constant 2176 : index
    %99 = vector.load %arg1[%c0_67, %c2176_68] : memref<8x4096xf32, #tpu.memory_space<vmem>>, vector<8x128xf32>
    %100 = vector.broadcast %18 : vector<1x128xf32> to vector<8x128xf32>
    %101 = arith.mulf %99, %100 : vector<8x128xf32>
    %102 = arith.addf %94, %101 : vector<8x128xf32>
    %c0_69 = arith.constant 0 : index
    %c2304_70 = arith.constant 2304 : index
    %103 = vector.load %arg1[%c0_69, %c2304_70] : memref<8x4096xf32, #tpu.memory_space<vmem>>, vector<8x128xf32>
    %104 = vector.broadcast %19 : vector<1x128xf32> to vector<8x128xf32>
    %105 = arith.mulf %103, %104 : vector<8x128xf32>
    %106 = arith.addf %98, %105 : vector<8x128xf32>
    %c0_71 = arith.constant 0 : index
    %c2432_72 = arith.constant 2432 : index
    %107 = vector.load %arg1[%c0_71, %c2432_72] : memref<8x4096xf32, #tpu.memory_space<vmem>>, vector<8x128xf32>
    %108 = vector.broadcast %20 : vector<1x128xf32> to vector<8x128xf32>
    %109 = arith.mulf %107, %108 : vector<8x128xf32>
    %110 = arith.addf %102, %109 : vector<8x128xf32>
    %c0_73 = arith.constant 0 : index
    %c2560_74 = arith.constant 2560 : index
    %111 = vector.load %arg1[%c0_73, %c2560_74] : memref<8x4096xf32, #tpu.memory_space<vmem>>, vector<8x128xf32>
    %112 = vector.broadcast %21 : vector<1x128xf32> to vector<8x128xf32>
    %113 = arith.mulf %111, %112 : vector<8x128xf32>
    %114 = arith.addf %106, %113 : vector<8x128xf32>
    %c0_75 = arith.constant 0 : index
    %c2688_76 = arith.constant 2688 : index
    %115 = vector.load %arg1[%c0_75, %c2688_76] : memref<8x4096xf32, #tpu.memory_space<vmem>>, vector<8x128xf32>
    %116 = vector.broadcast %22 : vector<1x128xf32> to vector<8x128xf32>
    %117 = arith.mulf %115, %116 : vector<8x128xf32>
    %118 = arith.addf %110, %117 : vector<8x128xf32>
    %c0_77 = arith.constant 0 : index
    %c2816_78 = arith.constant 2816 : index
    %119 = vector.load %arg1[%c0_77, %c2816_78] : memref<8x4096xf32, #tpu.memory_space<vmem>>, vector<8x128xf32>
    %120 = vector.broadcast %23 : vector<1x128xf32> to vector<8x128xf32>
    %121 = arith.mulf %119, %120 : vector<8x128xf32>
    %122 = arith.addf %114, %121 : vector<8x128xf32>
    %c0_79 = arith.constant 0 : index
    %c2944_80 = arith.constant 2944 : index
    %123 = vector.load %arg1[%c0_79, %c2944_80] : memref<8x4096xf32, #tpu.memory_space<vmem>>, vector<8x128xf32>
    %124 = vector.broadcast %24 : vector<1x128xf32> to vector<8x128xf32>
    %125 = arith.mulf %123, %124 : vector<8x128xf32>
    %126 = arith.addf %118, %125 : vector<8x128xf32>
    %c0_81 = arith.constant 0 : index
    %c3072_82 = arith.constant 3072 : index
    %127 = vector.load %arg1[%c0_81, %c3072_82] : memref<8x4096xf32, #tpu.memory_space<vmem>>, vector<8x128xf32>
    %128 = vector.broadcast %25 : vector<1x128xf32> to vector<8x128xf32>
    %129 = arith.mulf %127, %128 : vector<8x128xf32>
    %130 = arith.addf %122, %129 : vector<8x128xf32>
    %c0_83 = arith.constant 0 : index
    %c3200_84 = arith.constant 3200 : index
    %131 = vector.load %arg1[%c0_83, %c3200_84] : memref<8x4096xf32, #tpu.memory_space<vmem>>, vector<8x128xf32>
    %132 = vector.broadcast %26 : vector<1x128xf32> to vector<8x128xf32>
    %133 = arith.mulf %131, %132 : vector<8x128xf32>
    %134 = arith.addf %126, %133 : vector<8x128xf32>
    %c0_85 = arith.constant 0 : index
    %c3328_86 = arith.constant 3328 : index
    %135 = vector.load %arg1[%c0_85, %c3328_86] : memref<8x4096xf32, #tpu.memory_space<vmem>>, vector<8x128xf32>
    %136 = vector.broadcast %27 : vector<1x128xf32> to vector<8x128xf32>
    %137 = arith.mulf %135, %136 : vector<8x128xf32>
    %138 = arith.addf %130, %137 : vector<8x128xf32>
    %c0_87 = arith.constant 0 : index
    %c3456_88 = arith.constant 3456 : index
    %139 = vector.load %arg1[%c0_87, %c3456_88] : memref<8x4096xf32, #tpu.memory_space<vmem>>, vector<8x128xf32>
    %140 = vector.broadcast %28 : vector<1x128xf32> to vector<8x128xf32>
    %141 = arith.mulf %139, %140 : vector<8x128xf32>
    %142 = arith.addf %134, %141 : vector<8x128xf32>
    %c0_89 = arith.constant 0 : index
    %c3584_90 = arith.constant 3584 : index
    %143 = vector.load %arg1[%c0_89, %c3584_90] : memref<8x4096xf32, #tpu.memory_space<vmem>>, vector<8x128xf32>
    %144 = vector.broadcast %29 : vector<1x128xf32> to vector<8x128xf32>
    %145 = arith.mulf %143, %144 : vector<8x128xf32>
    %146 = arith.addf %138, %145 : vector<8x128xf32>
    %c0_91 = arith.constant 0 : index
    %c3712_92 = arith.constant 3712 : index
    %147 = vector.load %arg1[%c0_91, %c3712_92] : memref<8x4096xf32, #tpu.memory_space<vmem>>, vector<8x128xf32>
    %148 = vector.broadcast %30 : vector<1x128xf32> to vector<8x128xf32>
    %149 = arith.mulf %147, %148 : vector<8x128xf32>
    %150 = arith.addf %142, %149 : vector<8x128xf32>
    %c0_93 = arith.constant 0 : index
    %c3840_94 = arith.constant 3840 : index
    %151 = vector.load %arg1[%c0_93, %c3840_94] : memref<8x4096xf32, #tpu.memory_space<vmem>>, vector<8x128xf32>
    %152 = vector.broadcast %31 : vector<1x128xf32> to vector<8x128xf32>
    %153 = arith.mulf %151, %152 : vector<8x128xf32>
    %154 = arith.addf %146, %153 : vector<8x128xf32>
    %c0_95 = arith.constant 0 : index
    %c3968_96 = arith.constant 3968 : index
    %155 = vector.load %arg1[%c0_95, %c3968_96] : memref<8x4096xf32, #tpu.memory_space<vmem>>, vector<8x128xf32>
    %156 = vector.broadcast %32 : vector<1x128xf32> to vector<8x128xf32>
    %157 = arith.mulf %155, %156 : vector<8x128xf32>
    %158 = arith.addf %150, %157 : vector<8x128xf32>
    %159 = arith.addf %154, %158 : vector<8x128xf32>
    %cst = arith.constant dense<0.000000e+00> : vector<8xf32>
    %160 = vector.multi_reduction <add>, %159, %cst [1] : vector<8x128xf32> to vector<8xf32>
    %161 = vector.shape_cast %160 : vector<8xf32> to vector<8x1xf32>
    %162 = vector.broadcast %0 : f32 to vector<8x1xf32>
    %163 = arith.addf %161, %162 : vector<8x1xf32>
    %cst_97 = arith.constant 0.000000e+00 : f32
    %164 = vector.broadcast %cst_97 : f32 to vector<8x1xf32>
    %165 = arith.subf %164, %163 : vector<8x1xf32>
    %166 = math.exp %165 : vector<8x1xf32>
    %cst_98 = arith.constant 1.000000e+00 : f32
    %167 = vector.broadcast %cst_98 : f32 to vector<8x1xf32>
    %168 = arith.addf %167, %166 : vector<8x1xf32>
    %cst_99 = arith.constant 1.000000e+00 : f32
    %169 = vector.broadcast %cst_99 : f32 to vector<8x1xf32>
    %170 = arith.divf %169, %168 : vector<8x1xf32>
    %c0_100 = arith.constant 0 : index
    %c0_101 = arith.constant 0 : index
    %171 = vector.load %arg4[%c0_100, %c0_101] : memref<8x1xf32, #tpu.memory_space<vmem>>, vector<8x1xf32>
    tpu.vector_store %arg4[%c0_100, %c0_101], %170 {strides = array<i32>} : memref<8x1xf32, #tpu.memory_space<vmem>>, vector<8x1xf32>,
    return
  }
  func.func @transform_0(%arg0: i32) -> (i32, i32) {
    %c0_i32 = arith.constant 0 : i32
    %c0_i32_0 = arith.constant 0 : i32
    return %arg0, %c0_i32 : i32, i32
  }
  func.func @transform_1(%arg0: i32) -> (i32, i32) {
    %c0_i32 = arith.constant 0 : i32
    %c0_i32_0 = arith.constant 0 : i32
    %c0_i32_1 = arith.constant 0 : i32
    return %c0_i32, %c0_i32_0 : i32, i32
  }
  func.func @transform_2(%arg0: i32) -> i32 {
    %c0_i32 = arith.constant 0 : i32
    %c0_i32_0 = arith.constant 0 : i32
    return %c0_i32 : i32
  }
  func.func @transform_3(%arg0: i32) -> (i32, i32) {
    %c0_i32 = arith.constant 0 : i32
    %c0_i32_0 = arith.constant 0 : i32
    return %arg0, %c0_i32 : i32, i32
  }
}

</mosaic_0001>

<llo_original>
// kernel: binary_classifier_forward.1
$region0: #{binary_classifier_forward.1}
  #allocation0 [shape = 'u32[]', space=smem, size = 0x4, offset = 0x4, fixed_abs, tag = 'smem constant byte address 0x4 - core index']
  #allocation1 [shape = 'u32[72,128]{1,0:T(1,128)}', space=vmem, size = 0x9000, scoped, tag = 'internal scratch']
  #allocation2 [shape = 'f32[1]{0:T(128)S(6)}', space=smem, size = 0x200, scoped, tag = 'scoped memory for binary_classifier_forward.1']
  %s0 = inlined_call_operand.hbm [shape: f32[8,4096], index: 0, kind: input, shape index: {}]
  %s1 = inlined_call_operand.hbm [shape: f32[1,4096], index: 1, kind: input, shape index: {}]
  %s2 = inlined_call_operand.<no memory space> [shape: f32[1], index: 2, kind: input, shape index: {}]
  %s3 = inlined_call_operand.vmem [shape: f32[8,1], index: 3, kind: output, shape index: {}]
  %s4 = sld [smem:[#allocation0]]
  $region30: #{binary_classifier_forward.1} parent=0
    _
  %s6 = ssub.s32 1, %s4
  %s7 = scalar_select 0, %s6, %s4
  %8 = sst [smem:[#allocation2]] %s2
  $region1: #{binary_classifier_forward.1} parent=0
    #allocation3 [shape = 'u8[131072]{0}', space=vmem, size = 0x20000, scoped, tag = 'input window, operand 0, single buffered']
    #allocation4 [shape = 's32[1]{0}', space=sflag, size = 0x4, scoped, tag = 'scoped memory for binary_classifier_forward.1']
    #allocation5 [shape = 'u8[16384]{0}', space=vmem, size = 0x4000, scoped, tag = 'input window, operand 1, single buffered']
    #allocation6 [shape = 's32[1]{0}', space=sflag, size = 0x4, scoped, tag = 'scoped memory for binary_classifier_forward.1']
    %9 = vsyncpa [#allocation4], 0
    %10 = vsyncpa [#allocation6], 0
    // Predicated region
    $region2: #{binary_classifier_forward.1} parent=1 // pred_check
      _
    $region3: #{binary_classifier_forward.1} parent=1 // pred_check_branch
      %12 = sbr.rel (0) target = $region5
    $region4: #{binary_classifier_forward.1} parent=1 // pred_region
      %14 = vsyncadd [#allocation4], 0
      %s16 = sshll.u32 %s0, 4
      %s17 = int_to_ptr.hbm [resolvable:$true] %s16
      %s18 = sshll.u32 [#allocation3], 4
      %s19 = int_to_ptr.vmem [resolvable:$true] %s18
      %21 = dma.hbm_to_vmem [thread:$0]  %s17, 4096, %s19, [#allocation4]
    $region5: #{binary_classifier_forward.1} parent=1 // pred_fallthru
      _
    // Predicated region
    $region6: #{binary_classifier_forward.1} parent=1 // pred_check
      _
    $region7: #{binary_classifier_forward.1} parent=1 // pred_check_branch
      %23 = sbr.rel (0) target = $region9
    $region8: #{binary_classifier_forward.1} parent=1 // pred_region
      %25 = vsyncadd [#allocation6], 0
      %s27 = sshll.u32 %s1, 4
      %s28 = int_to_ptr.hbm [resolvable:$true] %s27
      %s29 = sshll.u32 [#allocation5], 4
      %s30 = int_to_ptr.vmem [resolvable:$true] %s29
      %32 = dma.hbm_to_vmem [thread:$0]  %s28, 512, %s30, [#allocation6]
    $region9: #{binary_classifier_forward.1} parent=1 // pred_fallthru
      _
    // Predicated region
    $region10: #{binary_classifier_forward.1} parent=1 // pred_check
      _
    $region11: #{binary_classifier_forward.1} parent=1 // pred_check_branch
      %34 = sbr.rel (0) target = $region13
    $region12: #{binary_classifier_forward.1} parent=1 // pred_region
      _
    $region13: #{binary_classifier_forward.1} parent=1 // pred_fallthru
      _
    // Predicated region
    $region14: #{binary_classifier_forward.1} parent=1 // pred_check
      _
    $region15: #{binary_classifier_forward.1} parent=1 // pred_check_branch
      %36 = sbr.rel (0) target = $region17
    $region16: #{binary_classifier_forward.1} parent=1 // pred_region
      %38 = dma.done [#allocation4], 4096
    $region17: #{binary_classifier_forward.1} parent=1 // pred_fallthru
      _
    // Predicated region
    $region18: #{binary_classifier_forward.1} parent=1 // pred_check
      _
    $region19: #{binary_classifier_forward.1} parent=1 // pred_check_branch
      %40 = sbr.rel (0) target = $region21
    $region20: #{binary_classifier_forward.1} parent=1 // pred_region
      %42 = dma.done [#allocation6], 512
    $region21: #{binary_classifier_forward.1} parent=1 // pred_fallthru
      _
    %s43 = sld [smem:[#allocation2]]
    %v44 = vld [vmem:[#allocation5] sm:$0x1]
    %v45 = vld [vmem:[#allocation5 + $0x1] sm:$0x1]
    %v46 = vld [vmem:[#allocation5 + $0x2] sm:$0x1]
    %v47 = vld [vmem:[#allocation5 + $0x3] sm:$0x1]
    %v48 = vld [vmem:[#allocation5 + $0x4] sm:$0x1]
    %v49 = vld [vmem:[#allocation5 + $0x5] sm:$0x1]
    %v50 = vld [vmem:[#allocation5 + $0x6] sm:$0x1]
    %v51 = vld [vmem:[#allocation5 + $0x7] sm:$0x1]
    %v52 = vld [vmem:[#allocation5 + $0x8] sm:$0x1]
    %v53 = vld [vmem:[#allocation5 + $0x9] sm:$0x1]
    %v54 = vld [vmem:[#allocation5 + $0xa] sm:$0x1]
    %v55 = vld [vmem:[#allocation5 + $0xb] sm:$0x1]
    %v56 = vld [vmem:[#allocation5 + $0xc] sm:$0x1]
    %v57 = vld [vmem:[#allocation5 + $0xd] sm:$0x1]
    %v58 = vld [vmem:[#allocation5 + $0xe] sm:$0x1]
    %v59 = vld [vmem:[#allocation5 + $0xf] sm:$0x1]
    %v60 = vld [vmem:[#allocation5 + $0x10] sm:$0x1]
    %v61 = vld [vmem:[#allocation5 + $0x11] sm:$0x1]
    %v62 = vld [vmem:[#allocation5 + $0x12] sm:$0x1]
    %v63 = vld [vmem:[#allocation5 + $0x13] sm:$0x1]
    %v64 = vld [vmem:[#allocation5 + $0x14] sm:$0x1]
    %v65 = vld [vmem:[#allocation5 + $0x15] sm:$0x1]
    %v66 = vld [vmem:[#allocation5 + $0x16] sm:$0x1]
    %v67 = vld [vmem:[#allocation5 + $0x17] sm:$0x1]
    %v68 = vld [vmem:[#allocation5 + $0x18] sm:$0x1]
    %v69 = vld [vmem:[#allocation5 + $0x19] sm:$0x1]
    %v70 = vld [vmem:[#allocation5 + $0x1a] sm:$0x1]
    %v71 = vld [vmem:[#allocation5 + $0x1b] sm:$0x1]
    %v72 = vld [vmem:[#allocation5 + $0x1c] sm:$0x1]
    %v73 = vld [vmem:[#allocation5 + $0x1d] sm:$0x1]
    %v74 = vld [vmem:[#allocation5 + $0x1e] sm:$0x1]
    %v75 = vld [vmem:[#allocation5 + $0x1f] sm:$0x1]
    %v76 = vld [vmem:[#allocation3] sm:$0xff]
    %v78 = vperm.slane %v44, 0
    %v80 = vmul.f32 %v76, %v78
    %v81 = vld [vmem:[#allocation3 + $0x8] sm:$0xff]
    %v83 = vperm.slane %v45, 0
    %v85 = vmul.f32 %v81, %v83
    %v86 = vld [vmem:[#allocation3 + $0x10] sm:$0xff]
    %v88 = vperm.slane %v46, 0
    %v90 = vmul.f32 %v86, %v88
    %v91 = vadd.f32 %v80, %v90
    %v92 = vld [vmem:[#allocation3 + $0x18] sm:$0xff]
    %v94 = vperm.slane %v47, 0
    %v96 = vmul.f32 %v92, %v94
    %v97 = vadd.f32 %v85, %v96
    %v98 = vld [vmem:[#allocation3 + $0x20] sm:$0xff]
    %v100 = vperm.slane %v48, 0
    %v102 = vmul.f32 %v98, %v100
    %v103 = vadd.f32 %v91, %v102
    %v104 = vld [vmem:[#allocation3 + $0x28] sm:$0xff]
    %v106 = vperm.slane %v49, 0
    %v108 = vmul.f32 %v104, %v106
    %v109 = vadd.f32 %v97, %v108
    %v110 = vld [vmem:[#allocation3 + $0x30] sm:$0xff]
    %v112 = vperm.slane %v50, 0
    %v114 = vmul.f32 %v110, %v112
    %v115 = vadd.f32 %v103, %v114
    %v116 = vld [vmem:[#allocation3 + $0x38] sm:$0xff]
    %v118 = vperm.slane %v51, 0
    %v120 = vmul.f32 %v116, %v118
    %v121 = vadd.f32 %v109, %v120
    %v122 = vld [vmem:[#allocation3 + $0x40] sm:$0xff]
    %v124 = vperm.slane %v52, 0
    %v126 = vmul.f32 %v122, %v124
    %v127 = vadd.f32 %v115, %v126
    %v128 = vld [vmem:[#allocation3 + $0x48] sm:$0xff]
    %v130 = vperm.slane %v53, 0
    %v132 = vmul.f32 %v128, %v130
    %v133 = vadd.f32 %v121, %v132
    %v134 = vld [vmem:[#allocation3 + $0x50] sm:$0xff]
    %v136 = vperm.slane %v54, 0
    %v138 = vmul.f32 %v134, %v136
    %v139 = vadd.f32 %v127, %v138
    %v140 = vld [vmem:[#allocation3 + $0x58] sm:$0xff]
    %v142 = vperm.slane %v55, 0
    %v144 = vmul.f32 %v140, %v142
    %v145 = vadd.f32 %v133, %v144
    %v146 = vld [vmem:[#allocation3 + $0x60] sm:$0xff]
    %v148 = vperm.slane %v56, 0
    %v150 = vmul.f32 %v146, %v148
    %v151 = vadd.f32 %v139, %v150
    %v152 = vld [vmem:[#allocation3 + $0x68] sm:$0xff]
    %v154 = vperm.slane %v57, 0
    %v156 = vmul.f32 %v152, %v154
    %v157 = vadd.f32 %v145, %v156
    %v158 = vld [vmem:[#allocation3 + $0x70] sm:$0xff]
    %v160 = vperm.slane %v58, 0
    %v162 = vmul.f32 %v158, %v160
    %v163 = vadd.f32 %v151, %v162
    %v164 = vld [vmem:[#allocation3 + $0x78] sm:$0xff]
    %v166 = vperm.slane %v59, 0
    %v168 = vmul.f32 %v164, %v166
    %v169 = vadd.f32 %v157, %v168
    %v170 = vld [vmem:[#allocation3 + $0x80] sm:$0xff]
    %v172 = vperm.slane %v60, 0
    %v174 = vmul.f32 %v170, %v172
    %v175 = vadd.f32 %v163, %v174
    %v176 = vld [vmem:[#allocation3 + $0x88] sm:$0xff]
    %v178 = vperm.slane %v61, 0
    %v180 = vmul.f32 %v176, %v178
    %v181 = vadd.f32 %v169, %v180
    %v182 = vld [vmem:[#allocation3 + $0x90] sm:$0xff]
    %v184 = vperm.slane %v62, 0
    %v186 = vmul.f32 %v182, %v184
    %v187 = vadd.f32 %v175, %v186
    %v188 = vld [vmem:[#allocation3 + $0x98] sm:$0xff]
    %v190 = vperm.slane %v63, 0
    %v192 = vmul.f32 %v188, %v190
    %v193 = vadd.f32 %v181, %v192
    %v194 = vld [vmem:[#allocation3 + $0xa0] sm:$0xff]
    %v196 = vperm.slane %v64, 0
    %v198 = vmul.f32 %v194, %v196
    %v199 = vadd.f32 %v187, %v198
    %v200 = vld [vmem:[#allocation3 + $0xa8] sm:$0xff]
    %v202 = vperm.slane %v65, 0
    %v204 = vmul.f32 %v200, %v202
    %v205 = vadd.f32 %v193, %v204
    %v206 = vld [vmem:[#allocation3 + $0xb0] sm:$0xff]
    %v208 = vperm.slane %v66, 0
    %v210 = vmul.f32 %v206, %v208
    %v211 = vadd.f32 %v199, %v210
    %v212 = vld [vmem:[#allocation3 + $0xb8] sm:$0xff]
    %v214 = vperm.slane %v67, 0
    %v216 = vmul.f32 %v212, %v214
    %v217 = vadd.f32 %v205, %v216
    %v218 = vld [vmem:[#allocation3 + $0xc0] sm:$0xff]
    %v220 = vperm.slane %v68, 0
    %v222 = vmul.f32 %v218, %v220
    %v223 = vadd.f32 %v211, %v222
    %v224 = vld [vmem:[#allocation3 + $0xc8] sm:$0xff]
    %v226 = vperm.slane %v69, 0
    %v228 = vmul.f32 %v224, %v226
    %v229 = vadd.f32 %v217, %v228
    %v230 = vld [vmem:[#allocation3 + $0xd0] sm:$0xff]
    %v232 = vperm.slane %v70, 0
    %v234 = vmul.f32 %v230, %v232
    %v235 = vadd.f32 %v223, %v234
    %v236 = vld [vmem:[#allocation3 + $0xd8] sm:$0xff]
    %v238 = vperm.slane %v71, 0
    %v240 = vmul.f32 %v236, %v238
    %v241 = vadd.f32 %v229, %v240
    %v242 = vld [vmem:[#allocation3 + $0xe0] sm:$0xff]
    %v244 = vperm.slane %v72, 0
    %v246 = vmul.f32 %v242, %v244
    %v247 = vadd.f32 %v235, %v246
    %v248 = vld [vmem:[#allocation3 + $0xe8] sm:$0xff]
    %v250 = vperm.slane %v73, 0
    %v252 = vmul.f32 %v248, %v250
    %v253 = vadd.f32 %v241, %v252
    %v254 = vld [vmem:[#allocation3 + $0xf0] sm:$0xff]
    %v256 = vperm.slane %v74, 0
    %v258 = vmul.f32 %v254, %v256
    %v259 = vadd.f32 %v247, %v258
    %v260 = vld [vmem:[#allocation3 + $0xf8] sm:$0xff]
    %v262 = vperm.slane %v75, 0
    %v264 = vmul.f32 %v260, %v262
    %v265 = vadd.f32 %v253, %v264
    %v266 = vadd.f32 %v259, %v265
    %267 = vadd.xlane.f32.xlu0 %v266
    %v268 = vpop.xlane.xlu0 %267
    %v269 = vstv %s43
    %v270 = vadd.f32 %v268, %v269
    %v271 = vsub.f32 0.0, %v270
    %v272 = vmul.f32 %v271, 1.442695
    %v273 = vpow.pop %v272
    %v274 = vadd.f32 %v273, 1.0
    %v275 = vrcp.pop %v274
    %v276 = vmul.f32 %v274, %v275
    %v277 = vsub.f32 1.0, %v276
    %v278 = vmul.f32 %v275, %v277
    %v279 = vadd.f32 %v275, %v278
    %vm280 = vweird.f32 %v274
    %vm281 = vweird.f32 %v275
    %vm282 = vmor %vm280, %vm281
    %v283 = vsel %vm282, %v275, %v279
    %v284 = vand.u32 2147483647, %v274
    %vm285 = vcmp.eq.f32.partialorder %v284, 8.507059e+37
    %v286 = vand.u32 %v274, 2147483648
    %v287 = vor.u32 1.1754944e-38, %v286
    %v288 = vsel %vm285, %v287, %v283
    %v289 = vmul.f32 1.0, %v288
    %vm290 = vcmask 7168
    %291 = vst.msk [vmem:[%s3] sm:$0xff] %vm290, %v289
    // Predicated region
    $region22: #{binary_classifier_forward.1} parent=1 // pred_check
      _
    $region23: #{binary_classifier_forward.1} parent=1 // pred_check_branch
      %293 = sbr.rel (0) target = $region25
    $region24: #{binary_classifier_forward.1} parent=1 // pred_region
      _
    $region25: #{binary_classifier_forward.1} parent=1 // pred_fallthru
      _
    // Predicated region
    $region26: #{binary_classifier_forward.1} parent=1 // pred_check
      _
    $region27: #{binary_classifier_forward.1} parent=1 // pred_check_branch
      %295 = sbr.rel (0) target = $region29
    $region28: #{binary_classifier_forward.1} parent=1 // pred_region
      _
    $region29: #{binary_classifier_forward.1} parent=1 // pred_fallthru
      _
    %296 = vsyncpa [#allocation4], 1
    %297 = vsyncpa [#allocation6], 1

</llo_original>
